<compile_context>
chip_gen: v7x
topology: tpu7x:2x2x1
jax: 0.10.0
libtpu: 0.0.40
codegen_flags: <defaults>
</compile_context>

<pallas_src>
import functools

import jax
import jax.numpy as jnp
from jax.experimental import pallas as pl
from jax.experimental.pallas import tpu as pltpu


_NEG_INF = -1000000000.0  # same constant PyTorch's masked_fill uses


def sdpa_kernel(*refs, inv_temperature, mask_mode, causal, block_q, mxu_dtype):
    """One (batch, head, q-block) step: scores -> masked softmax -> p @ v."""
    if mask_mode == "none":
        q_ref, k_ref, v_ref, out_ref, attn_ref = refs
        mask_ref = None
    else:
        q_ref, k_ref, v_ref, mask_ref, out_ref, attn_ref = refs

    # Scale q exactly once (single VPU pass), then feed the MXU in mxu_dtype.
    q = (q_ref[0, 0] * inv_temperature).astype(mxu_dtype)     # (block_q, Dk)
    k = k_ref[0, 0].astype(mxu_dtype)                         # (Lk, Dk)

    # Scores: contract the last dims directly (trans_b semantics) -> no
    # materialized K^T; accumulate in f32 on the MXU.
    s = jax.lax.dot_general(
        q, k, (((1,), (1,)), ((), ())),
        preferred_element_type=jnp.float32)                   # (block_q, Lk) f32

    if mask_ref is not None:
        m = mask_ref[0] if mask_mode == "bcast" else mask_ref[0, 0]
        # Note: a fully-masked row yields a uniform softmax row (matches the
        # PyTorch -1e9 masked_fill semantics).
        s = jnp.where(m == 0, _NEG_INF, s)

    if causal:
        # In-kernel causal mask: free VPU work under the MXU/DMA, and removes
        # the per-head mask HBM read stream entirely.
        q0 = pl.program_id(2) * block_q
        rows = jax.lax.broadcasted_iota(jnp.int32, s.shape, 0) + q0
        cols = jax.lax.broadcasted_iota(jnp.int32, s.shape, 1)
        s = jnp.where(rows >= cols, s, _NEG_INF)

    # Numerically-stable softmax, entirely in f32.  Exact divide: denom is
    # only (block_q, 1) elements, so approx reciprocal buys nothing and would
    # perturb the returned probabilities.
    s_max = jnp.max(s, axis=-1, keepdims=True)
    e = jnp.exp(s - s_max)
    p = e / jnp.sum(e, axis=-1, keepdims=True)                # (block_q, Lk) f32

    attn_ref[0, 0] = p.astype(attn_ref.dtype)                 # lane-dense (Lk last)
    out_ref[0, 0] = jnp.dot(
        p.astype(mxu_dtype), v_ref[0, 0].astype(mxu_dtype),
        preferred_element_type=jnp.float32).astype(out_ref.dtype)


def _block_vmem_bytes(block_q, Lk, Dk, mask_elem_bytes, attn_itemsize):
    """Single-buffer VMEM bytes for one grid step's blocks."""
    q_b = block_q * Dk * 4
    kv_b = 2 * Lk * Dk * 4
    m_b = block_q * Lk * mask_elem_bytes
    out_b = block_q * Dk * 4
    attn_b = block_q * Lk * attn_itemsize
    return q_b + kv_b + m_b + out_b + attn_b


def scaled_dot_product_attention(q, k, v, mask=None, *, temperature=None,
                                 causal=False, block_q=None,
                                 mxu_dtype=jnp.bfloat16,
                                 attn_dtype=jnp.float32):
    """softmax(q @ k^T / temperature) @ v ; returns (output, attn).

    q, k, v   : (B, H, Lq/Lk, Dk).
    mask      : None, (B, Lq, Lk), (B, 1, Lq, Lk) or (B, H, Lq, Lk); 0 = masked.
    causal    : generate a causal mask in-kernel (no mask array / HBM stream).
    mxu_dtype : dtype fed to the MXU (bf16 default; softmax/accum stay f32).
                Use jnp.float32 for bit-accurate probabilities.
    attn_dtype: dtype of the returned attention matrix (bf16 halves the
                dominant HBM write stream; contract change, so flag-gated).
    """
    B, H, Lq, Dk = q.shape
    Lk = k.shape[2]
    assert k.shape == (B, H, Lk, Dk) and v.shape == (B, H, Lk, Dk)
    if temperature is None:
        temperature = float(Dk) ** 0.5

    # --- mask normalization --------------------------------------------------
    mask_mode = "none"
    if mask is not None:
        if mask.ndim == 4:
            assert mask.shape[0] == B and mask.shape[2:] == (Lq, Lk), (
                f"bad mask shape {mask.shape}")
            if mask.shape[1] == 1:
                mask = mask.reshape(B, Lq, Lk)
                mask_mode = "bcast"
            elif mask.shape[1] == H:
                mask_mode = "per_head"
            else:
                raise ValueError(
                    f"mask head dim must be 1 or {H}, got {mask.shape[1]}")
        elif mask.ndim == 3:
            assert mask.shape == (B, Lq, Lk), f"bad mask shape {mask.shape}"
            mask_mode = "bcast"
        else:
            raise ValueError(f"mask must be 3D or 4D, got ndim={mask.ndim}")
        mask = mask.astype(jnp.int8)   # 4x fewer HBM bytes than int32

    attn_itemsize = jnp.dtype(attn_dtype).itemsize
    mask_elem = 1 if mask_mode != "none" else 0

    # --- tile-size / VMEM budgeting -------------------------------------------
    # Budget double-buffered blocks against the smallest physical VMEM we
    # target (v7x: 64 MiB) so the same kernel compiles everywhere; on
    # v5e/v6e (128 MiB) this still allows block_q up to 512.
    budget = 48 << 20
    if block_q is None:
        block_q = Lq
        for cand in (512, 256, 128):
            if (cand <= Lq and Lq % cand == 0 and
                    2 * _block_vmem_bytes(cand, Lk, Dk, mask_elem,
                                          attn_itemsize) <= budget):
                block_q = cand
                break
    else:
        block_q = min(block_q, Lq)
    assert Lq % block_q == 0, "Lq must be divisible by block_q"

    dbuf_bytes = 2 * _block_vmem_bytes(block_q, Lk, Dk, mask_elem, attn_itemsize)
    # K/V blocks only change at head boundaries; if VMEM-tight (long Lk on
    # v7x), single-buffer them -- one exposed K/V DMA per head is cheap.
    kv_kwargs = {}
    if dbuf_bytes > budget:
        kv_kwargs["pipeline_mode"] = pl.Buffered(1)
        dbuf_bytes -= 2 * Lk * Dk * 4
    vmem_limit = int(min(100 << 20, max(32 << 20, dbuf_bytes + (16 << 20))))

    grid = (B, H, Lq // block_q)

    in_specs = [
        pl.BlockSpec((1, 1, block_q, Dk), lambda b, h, i: (b, h, i, 0)),
        # K/V index maps ignore the q-block axis -> blocks stay resident
        # across the inner loop (no re-DMA within a head).
        pl.BlockSpec((1, 1, Lk, Dk), lambda b, h, i: (b, h, 0, 0), **kv_kwargs),
        pl.BlockSpec((1, 1, Lk, Dk), lambda b, h, i: (b, h, 0, 0), **kv_kwargs),
    ]
    args = [q, k, v]
    if mask_mode == "bcast":
        in_specs.append(pl.BlockSpec((1, block_q, Lk), lambda b, h, i: (b, i, 0)))
        args.append(mask)
    elif mask_mode == "per_head":
        in_specs.append(
            pl.BlockSpec((1, 1, block_q, Lk), lambda b, h, i: (b, h, i, 0)))
        args.append(mask)

    out_shape = (
        jax.ShapeDtypeStruct((B, H, Lq, Dk), q.dtype),
        jax.ShapeDtypeStruct((B, H, Lq, Lk), attn_dtype),
    )
    out_specs = (
        pl.BlockSpec((1, 1, block_q, Dk), lambda b, h, i: (b, h, i, 0)),
        pl.BlockSpec((1, 1, block_q, Lk), lambda b, h, i: (b, h, i, 0)),
    )

    # Advisory cost estimate so XLA schedules surrounding ops sensibly.
    flops = 4 * B * H * Lq * Lk * Dk
    transcendentals = B * H * Lq * Lk
    bytes_accessed = (B * H * (Lq + 2 * Lk) * Dk * 4          # q, k, v reads
                      + B * H * Lq * Lk * mask_elem           # mask reads
                      + B * H * Lq * Dk * 4                   # out writes
                      + B * H * Lq * Lk * attn_itemsize)      # attn writes
    cost = pl.CostEstimate(flops=flops, transcendentals=transcendentals,
                           bytes_accessed=bytes_accessed)

    kernel = functools.partial(
        sdpa_kernel, inv_temperature=1.0 / float(temperature),
        mask_mode=mask_mode, causal=causal, block_q=block_q,
        mxu_dtype=mxu_dtype)

    return pl.pallas_call(
        kernel,
        out_shape=out_shape,
        grid=grid,
        in_specs=in_specs,
        out_specs=out_specs,
        compiler_params=pltpu.CompilerParams(
            # Every grid step writes distinct output blocks -> fully parallel
            # (megacore-shardable on v7x); pipeliner free to reorder.
            dimension_semantics=("parallel", "parallel", "parallel"),
            vmem_limit_bytes=vmem_limit),
        cost_estimate=cost,
    )(*args)


def _reference(q, k, v, mask, temperature):
    """Pure-JAX reference mirroring the PyTorch forward (eval mode), f32."""
    hi = jax.lax.Precision.HIGHEST
    attn = jnp.einsum('bhqd,bhkd->bhqk', q / temperature, k, precision=hi)
    if mask is not None:
        if mask.ndim == 3:
            mask = mask[:, None, :, :]
        attn = jnp.where(mask == 0, _NEG_INF, attn)
    attn = jax.nn.softmax(attn, axis=-1)
    out = jnp.einsum('bhqk,bhkd->bhqd', attn, v, precision=hi)
    return out, attn


if __name__ == "__main__":
    # Hardware-aligned small shapes: seq and d_k are multiples of 128 lanes.
    B, H, L, Dk = 2, 4, 128, 128
    temperature = float(Dk) ** 0.5

    key = jax.random.PRNGKey(0)
    kq, kk, kv = jax.random.split(key, 3)
    q = jax.random.normal(kq, (B, H, L, Dk), jnp.float32)
    k = jax.random.normal(kk, (B, H, L, Dk), jnp.float32)
    v = jax.random.normal(kv, (B, H, L, Dk), jnp.float32)

    # Causal mask, int8 (1 = attend, 0 = masked); broadcast over heads.
    row = jax.lax.broadcasted_iota(jnp.int32, (L, L), 0)
    col = jax.lax.broadcasted_iota(jnp.int32, (L, L), 1)
    mask = jnp.broadcast_to((row >= col).astype(jnp.int8), (B, L, L))

    ref_out_m, ref_attn_m = _reference(q, k, v, mask, temperature)
    ref_out_nm, ref_attn_nm = _reference(q, k, v, None, temperature)

    # 1) In-kernel causal mask (no mask HBM stream), bf16 MXU inputs.
    #    bf16 MXU inputs (softmax stays f32): observed errors are ~1e-3–1e-2.
    out1, attn1 = scaled_dot_product_attention(
        q, k, v, causal=True, temperature=temperature)
    jax.block_until_ready((out1, attn1))
    assert jnp.allclose(attn1, ref_attn_m, atol=1e-2, rtol=1e-2)
    assert jnp.allclose(out1, ref_out_m, atol=3e-2, rtol=3e-2)

    # 2) Explicit broadcast int8 mask path, bf16 MXU inputs.
    out2, attn2 = scaled_dot_product_attention(
        q, k, v, mask, temperature=temperature)
    jax.block_until_ready((out2, attn2))
    assert jnp.allclose(attn2, ref_attn_m, atol=1e-2, rtol=1e-2)
    assert jnp.allclose(out2, ref_out_m, atol=3e-2, rtol=3e-2)

    # 3) mask=None path, with the optional bf16 attn output (halves the
    #    dominant attn writeback stream; out stays f32).
    out3, attn3 = scaled_dot_product_attention(
        q, k, v, None, temperature=temperature, attn_dtype=jnp.bfloat16)
    jax.block_until_ready((out3, attn3))
    assert jnp.allclose(attn3.astype(jnp.float32), ref_attn_nm,
                        atol=1e-2, rtol=1e-2)
    assert jnp.allclose(out3, ref_out_nm, atol=3e-2, rtol=3e-2)

    # 4) Exact path: f32 MXU inputs + exact divide, per-head (B,H,L,L) mask.
    #    Tight tolerance (typical error ~1e-6) — the previous 2e-3 loosening
    #    caused by the approx reciprocal is gone.
    mask4 = jnp.broadcast_to(mask[:, None, :, :], (B, H, L, L))
    out4, attn4 = scaled_dot_product_attention(
        q, k, v, mask4, temperature=temperature, mxu_dtype=jnp.float32)
    jax.block_until_ready((out4, attn4))
    assert jnp.allclose(attn4, ref_attn_m, atol=2e-4, rtol=2e-4)
    assert jnp.allclose(out4, ref_out_m, atol=2e-4, rtol=2e-4)

    print("KERNEL_OK")
</pallas_src>

<mosaic_0001>
module attributes {stable_mosaic.version = 11 : i64} {
  func.func @sdpa_kernel(%arg0: i32, %arg1: i32, %arg2: i32, %arg3: memref<1x1x128x128xf32, #tpu.memory_space<vmem>>, %arg4: memref<1x1x128x128xf32, #tpu.memory_space<vmem>>, %arg5: memref<1x1x128x128xf32, #tpu.memory_space<vmem>>, %arg6: memref<1x1x128x128xf32, #tpu.memory_space<vmem>>, %arg7: memref<1x1x128x128xf32, #tpu.memory_space<vmem>>) attributes {dimension_semantics = [#tpu.dimension_semantics<parallel>, #tpu.dimension_semantics<parallel>, #tpu.dimension_semantics<parallel>], iteration_bounds = array<i64: 2, 4, 1>, scalar_prefetch = 0 : i64, scratch_operands = 0 : i64, tpu.core_type = #tpu.core_type<tc>, window_params = [{transform_indices = @transform_0, window_bounds = array<i64: 1, 1, 128, 128>}, {transform_indices = @transform_1, window_bounds = array<i64: 1, 1, 128, 128>}, {transform_indices = @transform_2, window_bounds = array<i64: 1, 1, 128, 128>}, {transform_indices = @transform_3, window_bounds = array<i64: 1, 1, 128, 128>}, {transform_indices = @transform_4, window_bounds = array<i64: 1, 1, 128, 128>}]} {
    %c0 = arith.constant 0 : index
    %c0_0 = arith.constant 0 : index
    %c0_1 = arith.constant 0 : index
    %c0_2 = arith.constant 0 : index
    %0 = vector.load %arg3[%c0, %c0_0, %c0_1, %c0_2] : memref<1x1x128x128xf32, #tpu.memory_space<vmem>>, vector<1x1x128x128xf32>
    %1 = vector.shape_cast %0 : vector<1x1x128x128xf32> to vector<128x128xf32>
    %cst = arith.constant 0.0883883461 : f32
    %2 = vector.broadcast %cst : f32 to vector<128x128xf32>
    %3 = arith.mulf %1, %2 : vector<128x128xf32>
    %4 = arith.truncf %3 : vector<128x128xf32> to vector<128x128xbf16>
    %c0_3 = arith.constant 0 : index
    %c0_4 = arith.constant 0 : index
    %c0_5 = arith.constant 0 : index
    %c0_6 = arith.constant 0 : index
    %5 = vector.load %arg4[%c0_3, %c0_4, %c0_5, %c0_6] : memref<1x1x128x128xf32, #tpu.memory_space<vmem>>, vector<1x1x128x128xf32>
    %6 = vector.shape_cast %5 : vector<1x1x128x128xf32> to vector<128x128xf32>
    %7 = arith.truncf %6 : vector<128x128xf32> to vector<128x128xbf16>
    %cst_7 = arith.constant dense<0.000000e+00> : vector<128x128xf32>
    %8 = tpu.matmul %4, %7, %cst_7 {dimension_numbers = #tpu.dot_dimension_numbers<[1], [1], [0], [0], [0, 0, 1, 0], [], []>} : vector<128x128xbf16>, vector<128x128xbf16>, vector<128x128xf32> -> vector<128x128xf32>
    %c128_i32 = arith.constant 128 : i32
    %9 = arith.muli %arg2, %c128_i32 : i32
    %10 = tpu.iota {dimensions = array<i32: 0>} : vector<128x128xi32>
    %11 = vector.broadcast %9 : i32 to vector<128x128xi32>
    %12 = arith.addi %10, %11 : vector<128x128xi32>
    %13 = tpu.iota {dimensions = array<i32: 1>} : vector<128x128xi32>
    %14 = arith.cmpi sge, %12, %13 : vector<128x128xi32>
    %cst_8 = arith.constant -1.000000e+09 : f32
    %15 = vector.broadcast %cst_8 : f32 to vector<128x128xf32>
    %16 = arith.select %14, %8, %15 : vector<128x128xi1>, vector<128x128xf32>
    %cst_9 = arith.constant dense<0xFF800000> : vector<128xf32>
    %17 = vector.multi_reduction <maximumf>, %16, %cst_9 [1] : vector<128x128xf32> to vector<128xf32>
    %18 = vector.shape_cast %17 : vector<128xf32> to vector<128x1xf32>
    %19 = vector.broadcast %18 : vector<128x1xf32> to vector<128x128xf32>
    %20 = arith.subf %16, %19 : vector<128x128xf32>
    %21 = math.exp %20 : vector<128x128xf32>
    %cst_10 = arith.constant dense<0.000000e+00> : vector<128xf32>
    %22 = vector.multi_reduction <add>, %21, %cst_10 [1] : vector<128x128xf32> to vector<128xf32>
    %23 = vector.shape_cast %22 : vector<128xf32> to vector<128x1xf32>
    %24 = vector.broadcast %23 : vector<128x1xf32> to vector<128x128xf32>
    %25 = arith.divf %21, %24 : vector<128x128xf32>
    %c0_11 = arith.constant 0 : index
    %c0_12 = arith.constant 0 : index
    %c0_13 = arith.constant 0 : index
    %c0_14 = arith.constant 0 : index
    %26 = vector.load %arg7[%c0_11, %c0_12, %c0_13, %c0_14] : memref<1x1x128x128xf32, #tpu.memory_space<vmem>>, vector<1x1x128x128xf32>
    %27 = vector.shape_cast %26 : vector<1x1x128x128xf32> to vector<128x128xf32>
    %28 = vector.shape_cast %25 : vector<128x128xf32> to vector<1x1x128x128xf32>
    tpu.vector_store %arg7[%c0_11, %c0_12, %c0_13, %c0_14], %28 {strides = array<i32>} : memref<1x1x128x128xf32, #tpu.memory_space<vmem>>, vector<1x1x128x128xf32>,
    %29 = arith.truncf %25 : vector<128x128xf32> to vector<128x128xbf16>
    %c0_15 = arith.constant 0 : index
    %c0_16 = arith.constant 0 : index
    %c0_17 = arith.constant 0 : index
    %c0_18 = arith.constant 0 : index
    %30 = vector.load %arg5[%c0_15, %c0_16, %c0_17, %c0_18] : memref<1x1x128x128xf32, #tpu.memory_space<vmem>>, vector<1x1x128x128xf32>
    %31 = vector.shape_cast %30 : vector<1x1x128x128xf32> to vector<128x128xf32>
    %32 = arith.truncf %31 : vector<128x128xf32> to vector<128x128xbf16>
    %cst_19 = arith.constant dense<0.000000e+00> : vector<128x128xf32>
    %33 = tpu.matmul %29, %32, %cst_19 {dimension_numbers = #tpu.dot_dimension_numbers<[1], [0], [0], [1], [0, 0, 1, 1], [], []>} : vector<128x128xbf16>, vector<128x128xbf16>, vector<128x128xf32> -> vector<128x128xf32>
    %c0_20 = arith.constant 0 : index
    %c0_21 = arith.constant 0 : index
    %c0_22 = arith.constant 0 : index
    %c0_23 = arith.constant 0 : index
    %34 = vector.load %arg6[%c0_20, %c0_21, %c0_22, %c0_23] : memref<1x1x128x128xf32, #tpu.memory_space<vmem>>, vector<1x1x128x128xf32>
    %35 = vector.shape_cast %34 : vector<1x1x128x128xf32> to vector<128x128xf32>
    %36 = vector.shape_cast %33 : vector<128x128xf32> to vector<1x1x128x128xf32>
    tpu.vector_store %arg6[%c0_20, %c0_21, %c0_22, %c0_23], %36 {strides = array<i32>} : memref<1x1x128x128xf32, #tpu.memory_space<vmem>>, vector<1x1x128x128xf32>,
    return
  }
  func.func @transform_0(%arg0: i32, %arg1: i32, %arg2: i32) -> (i32, i32, i32, i32) {
    %c0_i32 = arith.constant 0 : i32
    %c0_i32_0 = arith.constant 0 : i32
    return %arg0, %arg1, %arg2, %c0_i32 : i32, i32, i32, i32
  }
  func.func @transform_1(%arg0: i32, %arg1: i32, %arg2: i32) -> (i32, i32, i32, i32) {
    %c0_i32 = arith.constant 0 : i32
    %c0_i32_0 = arith.constant 0 : i32
    %c0_i32_1 = arith.constant 0 : i32
    return %arg0, %arg1, %c0_i32, %c0_i32_0 : i32, i32, i32, i32
  }
  func.func @transform_2(%arg0: i32, %arg1: i32, %arg2: i32) -> (i32, i32, i32, i32) {
    %c0_i32 = arith.constant 0 : i32
    %c0_i32_0 = arith.constant 0 : i32
    %c0_i32_1 = arith.constant 0 : i32
    return %arg0, %arg1, %c0_i32, %c0_i32_0 : i32, i32, i32, i32
  }
  func.func @transform_3(%arg0: i32, %arg1: i32, %arg2: i32) -> (i32, i32, i32, i32) {
    %c0_i32 = arith.constant 0 : i32
    %c0_i32_0 = arith.constant 0 : i32
    return %arg0, %arg1, %arg2, %c0_i32 : i32, i32, i32, i32
  }
  func.func @transform_4(%arg0: i32, %arg1: i32, %arg2: i32) -> (i32, i32, i32, i32) {
    %c0_i32 = arith.constant 0 : i32
    %c0_i32_0 = arith.constant 0 : i32
    return %arg0, %arg1, %arg2, %c0_i32 : i32, i32, i32, i32
  }
}

</mosaic_0001>

<llo_original>
// kernel: tpu_custom_call.1
$region0: #{tpu_custom_call.1}
  #allocation0 [shape = 'u32[]', space=smem, size = 0x4, offset = 0x4, fixed_abs, tag = 'smem constant byte address 0x4 - core index']
  #allocation1 [shape = 'u32[144,128]{1,0:T(1,128)}', space=vmem, size = 0x12000, scoped, tag = 'internal scratch']
  %s0 = inlined_call_operand.hbm [shape: f32[2,4,128,128], index: 0, kind: input, shape index: {}]
  %s1 = inlined_call_operand.hbm [shape: f32[2,4,128,128], index: 1, kind: input, shape index: {}]
  %s2 = inlined_call_operand.hbm [shape: f32[2,4,128,128], index: 2, kind: input, shape index: {}]
  %s3 = inlined_call_operand.hbm [shape: f32[2,4,128,128], index: 3, kind: output, shape index: {0}]
  %s4 = inlined_call_operand.hbm [shape: f32[2,4,128,128], index: 4, kind: output, shape index: {1}]
  %5 = xla_tuple %s3, %s4
  %s6 = sld [smem:[#allocation0]]
  $region65: #{tpu_custom_call.1} parent=0
    _
  %s8 = ssub.s32 1, %s6
  %s9 = scalar_select 0, %s8, %s6
  $region1: #{tpu_custom_call.1} parent=0
    #allocation2 [shape = 'u8[131072]{0}', space=vmem, size = 0x20000, scoped, tag = 'input window, operand 0']
    #allocation3 [shape = 's32[2]{0}', space=sflag, size = 0x8, scoped, tag = 'scoped memory for tpu_custom_call.1']
    #allocation4 [shape = 's32[2]{0}', space=sflag, size = 0x8, scoped, tag = 'scoped memory for tpu_custom_call.1']
    #allocation5 [shape = 'u8[131072]{0}', space=vmem, size = 0x20000, scoped, tag = 'input window, operand 1']
    #allocation6 [shape = 's32[2]{0}', space=sflag, size = 0x8, scoped, tag = 'scoped memory for tpu_custom_call.1']
    #allocation7 [shape = 'u8[131072]{0}', space=vmem, size = 0x20000, scoped, tag = 'input window, operand 2']
    #allocation8 [shape = 'u8[131072]{0}', space=vmem, size = 0x20000, scoped, tag = 'output window, operand 0']
    #allocation9 [shape = 'u8[131072]{0}', space=vmem, size = 0x20000, scoped, tag = 'output window, operand 1']
    #allocation10 [shape = 's32[2]{0}', space=sflag, size = 0x8, scoped, tag = 'scoped memory for tpu_custom_call.1']
    %10 = vsyncpa [#allocation3], 0
    %s11 = scalar_lea.sflag [#allocation3], 1
    %12 = vsyncpa %s11, 0
    %13 = vsyncpa [#allocation6], 0
    %s14 = scalar_lea.sflag [#allocation6], 1
    %15 = vsyncpa %s14, 0
    %16 = vsyncpa [#allocation4], 0
    %s17 = scalar_lea.sflag [#allocation4], 1
    %18 = vsyncpa %s17, 0
    %19 = vsyncpa [#allocation10], 0
    %s20 = scalar_lea.sflag [#allocation10], 1
    %21 = vsyncpa %s20, 0
    loop: start=0, step=1, limit=10
    $region2: #{tpu_custom_call.1} parent=1 // loop_pre_header
      _
    $region3: #{tpu_custom_call.1} parent=1 // loop_header
      %s23 = sphi 0, %s27
      %p24 = scmp.ge.s32.totalorder %s23, 10
      %s30 = sphi 0, %s49
      %s31 = sphi 0, %s45
      %s32 = sphi 0, %s41
      %s33 = sphi 0, %s30
      %s34 = sphi 0, %s31
      %s35 = sphi 0, %s32
      %s36 = sphi 0, %s33
      %s37 = sphi 0, %s34
      %s38 = sphi 0, %s35
      %s56 = sphi 0, %s58
      %s59 = sphi 0, %s56
      %s60 = sphi 0, %s59
      %s76 = sphi 0, %s60
      %s84 = sphi 0, %s86
      %s87 = sphi 0, %s84
      %s88 = sphi 0, %s87
      %s104 = sphi 0, %s88
      %s112 = sphi 0, %s114
      %s115 = sphi 0, %s112
      %s116 = sphi 0, %s115
      %s132 = sphi 0, %s116
      %s142 = sphi 0, %s144
      %s145 = sphi 0, %s142
      %s146 = sphi 0, %s145
      %s162 = sphi 0, %s146
      %s172 = sphi 0, %s174
      %s175 = sphi 0, %s172
      %s176 = sphi 0, %s175
      %s192 = sphi 0, %s176
    $region4: #{tpu_custom_call.1} parent=1 // loop_header_branch
      %26 = sbr.rel (%p24) target = $region8
    $region5: #{tpu_custom_call.1} parent=1 // loop_body
      %s28 = ssub.s32 %s23, 1
      %s29 = ssub.s32 %s23, 2
      %s39 = sadd.s32 1, %s32
      %p40 = scmp.ge.s32.totalorder %s39, 1
      %s41 = scalar_select %p40, 0, %s39
      %s42 = sadd.s32 1, %s31
      %s43 = scalar_select %p40, %s42, %s31
      %p44 = scmp.ge.s32.totalorder %s43, 4
      %s45 = scalar_select %p44, 0, %s43
      %s46 = sadd.s32 1, %s30
      %s47 = scalar_select %p44, %s46, %s30
      %p48 = scmp.ge.s32.totalorder %s47, 2
      %s49 = scalar_select %p48, 0, %s47
      %s50 = ssub.s32 %s30, %s49
      %s51 = ssub.s32 %s31, %s45
      %s52 = sor.u32 %s50, %s51
      %s53 = ssub.s32 %s32, %s41
      %s54 = sor.u32 %s52, %s53
      %p55 = scmp.eq.s32.totalorder %s54, 0
      %s57 = sadd.s32 %s56, 1
      %s58 = scalar_select %p55, %s56, %s57
      %p61 = pneg %p55
      %p62 = scmp.eq.s32.totalorder %s23, 7
      %p63 = por %p61, %p62
      %p64 = scmp.ne.s32.totalorder %s56, %s59
      %p65 = scmp.eq.s32.totalorder %s23, 0
      %p66 = por %p64, %p65
      %p67 = scmp.ne.s32.totalorder %s56, %s59
      %p68 = scmp.eq.s32.totalorder %s28, 7
      %p69 = por %p67, %p68
      %p70 = scmp.ne.s32.totalorder %s59, %s60
      %p71 = scmp.eq.s32.totalorder %s28, 0
      %p72 = por %p70, %p71
      %p73 = scmp.ne.s32.totalorder %s59, %s60
      %p74 = scmp.eq.s32.totalorder %s29, 7
      %p75 = por %p73, %p74
      %p77 = scmp.ne.s32.totalorder %s60, %s76
      %p78 = scmp.eq.s32.totalorder %s29, 0
      %p79 = por %p77, %p78
      %s80 = ssub.s32 %s30, %s49
      %s81 = ssub.s32 %s31, %s45
      %s82 = sor.u32 %s80, %s81
      %p83 = scmp.eq.s32.totalorder %s82, 0
      %s85 = sadd.s32 %s84, 1
      %s86 = scalar_select %p83, %s84, %s85
      %p89 = pneg %p83
      %p90 = scmp.eq.s32.totalorder %s23, 7
      %p91 = por %p89, %p90
      %p92 = scmp.ne.s32.totalorder %s84, %s87
      %p93 = scmp.eq.s32.totalorder %s23, 0
      %p94 = por %p92, %p93
      %p95 = scmp.ne.s32.totalorder %s84, %s87
      %p96 = scmp.eq.s32.totalorder %s28, 7
      %p97 = por %p95, %p96
      %p98 = scmp.ne.s32.totalorder %s87, %s88
      %p99 = scmp.eq.s32.totalorder %s28, 0
      %p100 = por %p98, %p99
      %p101 = scmp.ne.s32.totalorder %s87, %s88
      %p102 = scmp.eq.s32.totalorder %s29, 7
      %p103 = por %p101, %p102
      %p105 = scmp.ne.s32.totalorder %s88, %s104
      %p106 = scmp.eq.s32.totalorder %s29, 0
      %p107 = por %p105, %p106
      %s108 = ssub.s32 %s30, %s49
      %s109 = ssub.s32 %s31, %s45
      %s110 = sor.u32 %s108, %s109
      %p111 = scmp.eq.s32.totalorder %s110, 0
      %s113 = sadd.s32 %s112, 1
      %s114 = scalar_select %p111, %s112, %s113
      %p117 = pneg %p111
      %p118 = scmp.eq.s32.totalorder %s23, 7
      %p119 = por %p117, %p118
      %p120 = scmp.ne.s32.totalorder %s112, %s115
      %p121 = scmp.eq.s32.totalorder %s23, 0
      %p122 = por %p120, %p121
      %p123 = scmp.ne.s32.totalorder %s112, %s115
      %p124 = scmp.eq.s32.totalorder %s28, 7
      %p125 = por %p123, %p124
      %p126 = scmp.ne.s32.totalorder %s115, %s116
      %p127 = scmp.eq.s32.totalorder %s28, 0
      %p128 = por %p126, %p127
      %p129 = scmp.ne.s32.totalorder %s115, %s116
      %p130 = scmp.eq.s32.totalorder %s29, 7
      %p131 = por %p129, %p130
      %p133 = scmp.ne.s32.totalorder %s116, %s132
      %p134 = scmp.eq.s32.totalorder %s29, 0
      %p135 = por %p133, %p134
      %s136 = ssub.s32 %s30, %s49
      %s137 = ssub.s32 %s31, %s45
      %s138 = sor.u32 %s136, %s137
      %s139 = ssub.s32 %s32, %s41
      %s140 = sor.u32 %s138, %s139
      %p141 = scmp.eq.s32.totalorder %s140, 0
      %s143 = sadd.s32 %s142, 1
      %s144 = scalar_select %p141, %s142, %s143
      %p147 = pneg %p141
      %p148 = scmp.eq.s32.totalorder %s23, 7
      %p149 = por %p147, %p148
      %p150 = scmp.ne.s32.totalorder %s142, %s145
      %p151 = scmp.eq.s32.totalorder %s23, 0
      %p152 = por %p150, %p151
      %p153 = scmp.ne.s32.totalorder %s142, %s145
      %p154 = scmp.eq.s32.totalorder %s28, 7
      %p155 = por %p153, %p154
      %p156 = scmp.ne.s32.totalorder %s145, %s146
      %p157 = scmp.eq.s32.totalorder %s28, 0
      %p158 = por %p156, %p157
      %p159 = scmp.ne.s32.totalorder %s145, %s146
      %p160 = scmp.eq.s32.totalorder %s29, 7
      %p161 = por %p159, %p160
      %p163 = scmp.ne.s32.totalorder %s146, %s162
      %p164 = scmp.eq.s32.totalorder %s29, 0
      %p165 = por %p163, %p164
      %s166 = ssub.s32 %s30, %s49
      %s167 = ssub.s32 %s31, %s45
      %s168 = sor.u32 %s166, %s167
      %s169 = ssub.s32 %s32, %s41
      %s170 = sor.u32 %s168, %s169
      %p171 = scmp.eq.s32.totalorder %s170, 0
      %s173 = sadd.s32 %s172, 1
      %s174 = scalar_select %p171, %s172, %s173
      %p177 = pneg %p171
      %p178 = scmp.eq.s32.totalorder %s23, 7
      %p179 = por %p177, %p178
      %p180 = scmp.ne.s32.totalorder %s172, %s175
      %p181 = scmp.eq.s32.totalorder %s23, 0
      %p182 = por %p180, %p181
      %p183 = scmp.ne.s32.totalorder %s172, %s175
      %p184 = scmp.eq.s32.totalorder %s28, 7
      %p185 = por %p183, %p184
      %p186 = scmp.ne.s32.totalorder %s175, %s176
      %p187 = scmp.eq.s32.totalorder %s28, 0
      %p188 = por %p186, %p187
      %p189 = scmp.ne.s32.totalorder %s175, %s176
      %p190 = scmp.eq.s32.totalorder %s29, 7
      %p191 = por %p189, %p190
      %p193 = scmp.ne.s32.totalorder %s176, %s192
      %p194 = scmp.eq.s32.totalorder %s29, 0
      %p195 = por %p193, %p194
      %p196 = scmp.le.s32.totalorder 1, %s23
      %p197 = scmp.lt.s32.totalorder %s23, 9
      %p198 = pnand %p196, %p197
      %p199 = pneg %p198
      // Predicated region
      $region9: #{tpu_custom_call.1} parent=5 // pred_check
        _
      $region10: #{tpu_custom_call.1} parent=5 // pred_check_branch
        %201 = sbr.rel (%p198) target = $region12
      $region11: #{tpu_custom_call.1} parent=5 // pred_region
        %s202 = ssub.s32 %s23, 1
      $region12: #{tpu_custom_call.1} parent=5 // pred_fallthru
        _
      %p203 = scmp.lt.s32.totalorder %s23, 8
      // Predicated region
      $region13: #{tpu_custom_call.1} parent=5 // pred_check
        %p204 = pneg %p203
      $region14: #{tpu_custom_call.1} parent=5 // pred_check_branch
        %206 = sbr.rel (%p204) target = $region16
      $region15: #{tpu_custom_call.1} parent=5 // pred_region
        // Predicated region
        $region17: #{tpu_custom_call.1} parent=15 // pred_check
          %p207 = pneg %p66
        $region18: #{tpu_custom_call.1} parent=15 // pred_check_branch
          %209 = sbr.rel (%p207) target = $region20
        $region19: #{tpu_custom_call.1} parent=15 // pred_region
          %s210 = sand.u32 %s56, 1
          %s211 = scalar_lea.sflag [#allocation3], %s210
          %s212 = sand.u32 %s56, 1
          %s213 = smul.addr %s212, 128
          %s214 = scalar_lea.vmem [#allocation2], %s213
          %s215 = smul.u32 16, %s32
          %s217 = ssub.s32 2048, 2048
          %218 = vsyncadd %s211, %s217
          %s219 = smul.addr %s31, 16
          %s220 = sadd.s32 %s215, %s219
          %s221 = smul.addr %s30, 64
          %s222 = sadd.s32 %s220, %s221
          %s223 = smul.addr %s222, 128
          %s224 = scalar_lea.hbm %s0, %s223
          %s225 = sshll.u32 %s214, 4
          %s226 = int_to_ptr.vmem [resolvable:$true] %s225
          %231 = dma.hbm_to_vmem [thread:$0]  %s224, 2048, %s226, %s211, 128, 128, 8
        $region20: #{tpu_custom_call.1} parent=15 // pred_fallthru
          _
        // Predicated region
        $region21: #{tpu_custom_call.1} parent=15 // pred_check
          %p232 = pneg %p94
        $region22: #{tpu_custom_call.1} parent=15 // pred_check_branch
          %234 = sbr.rel (%p232) target = $region24
        $region23: #{tpu_custom_call.1} parent=15 // pred_region
          %s235 = sand.u32 %s23, 1
          %s236 = scalar_lea.sflag [#allocation6], %s235
          %s237 = sand.u32 %s84, 1
          %s238 = smul.addr %s237, 128
          %s239 = scalar_lea.vmem [#allocation5], %s238
          %s241 = ssub.s32 2048, 2048
          %242 = vsyncadd %s236, %s241
          %s243 = smul.addr %s31, 16
          %s244 = smul.addr %s30, 64
          %s245 = sadd.s32 %s243, %s244
          %s246 = smul.addr %s245, 128
          %s247 = scalar_lea.hbm %s1, %s246
          %s248 = sshll.u32 %s239, 4
          %s249 = int_to_ptr.vmem [resolvable:$true] %s248
          %254 = dma.hbm_to_vmem [thread:$0]  %s247, 2048, %s249, %s236, 128, 128, 8
        $region24: #{tpu_custom_call.1} parent=15 // pred_fallthru
          _
        // Predicated region
        $region25: #{tpu_custom_call.1} parent=15 // pred_check
          %p255 = pneg %p122
        $region26: #{tpu_custom_call.1} parent=15 // pred_check_branch
          %257 = sbr.rel (%p255) target = $region28
        $region27: #{tpu_custom_call.1} parent=15 // pred_region
          %s258 = sand.u32 %s23, 1
          %s259 = scalar_lea.sflag [#allocation6], %s258
          %s260 = sand.u32 %s112, 1
          %s261 = smul.addr %s260, 128
          %s262 = scalar_lea.vmem [#allocation7], %s261
          %s264 = ssub.s32 2048, 2048
          %265 = vsyncadd %s259, %s264
          %s266 = smul.addr %s31, 16
          %s267 = smul.addr %s30, 64
          %s268 = sadd.s32 %s266, %s267
          %s269 = smul.addr %s268, 128
          %s270 = scalar_lea.hbm %s2, %s269
          %s271 = sshll.u32 %s262, 4
          %s272 = int_to_ptr.vmem [resolvable:$true] %s271
          %277 = dma.hbm_to_vmem [thread:$0]  %s270, 2048, %s272, %s259, 128, 128, 8
        $region28: #{tpu_custom_call.1} parent=15 // pred_fallthru
          _
      $region16: #{tpu_custom_call.1} parent=5 // pred_fallthru
        _
      %p278 = scmp.le.s32.totalorder 1, %s23
      %p279 = scmp.lt.s32.totalorder %s23, 9
      %p280 = pnand %p278, %p279
      %p281 = pneg %p280
      // Predicated region
      $region29: #{tpu_custom_call.1} parent=5 // pred_check
        _
      $region30: #{tpu_custom_call.1} parent=5 // pred_check_branch
        %283 = sbr.rel (%p280) target = $region32
      $region31: #{tpu_custom_call.1} parent=5 // pred_region
        %s284 = ssub.s32 %s23, 1
        %s285 = sand.u32 %s59, 1
        %s286 = scalar_lea.sflag [#allocation3], %s285
        %s287 = sand.u32 %s59, 1
        %s288 = smul.addr %s287, 128
        %s289 = scalar_lea.vmem [#allocation2], %s288
        // Predicated region
        $region33: #{tpu_custom_call.1} parent=31 // pred_check
          %p290 = pneg %p72
        $region34: #{tpu_custom_call.1} parent=31 // pred_check_branch
          %292 = sbr.rel (%p290) target = $region36
        $region35: #{tpu_custom_call.1} parent=31 // pred_region
          %293 = dma.done %s286, 2048
        $region36: #{tpu_custom_call.1} parent=31 // pred_fallthru
          _
        %s294 = sand.u32 %s28, 1
        %s295 = scalar_lea.sflag [#allocation6], %s294
        %s296 = sand.u32 %s87, 1
        %s297 = smul.addr %s296, 128
        %s298 = scalar_lea.vmem [#allocation5], %s297
        // Predicated region
        $region37: #{tpu_custom_call.1} parent=31 // pred_check
          %p299 = pneg %p100
        $region38: #{tpu_custom_call.1} parent=31 // pred_check_branch
          %301 = sbr.rel (%p299) target = $region40
        $region39: #{tpu_custom_call.1} parent=31 // pred_region
          %302 = dma.done %s295, 2048
        $region40: #{tpu_custom_call.1} parent=31 // pred_fallthru
          _
        %s303 = sand.u32 %s28, 1
        %s304 = scalar_lea.sflag [#allocation6], %s303
        %s305 = sand.u32 %s115, 1
        %s306 = smul.addr %s305, 128
        %s307 = scalar_lea.vmem [#allocation7], %s306
        // Predicated region
        $region41: #{tpu_custom_call.1} parent=31 // pred_check
          %p308 = pneg %p128
        $region42: #{tpu_custom_call.1} parent=31 // pred_check_branch
          %310 = sbr.rel (%p308) target = $region44
        $region43: #{tpu_custom_call.1} parent=31 // pred_region
          %311 = dma.done %s304, 2048
        $region44: #{tpu_custom_call.1} parent=31 // pred_fallthru
          _
        %s312 = sand.u32 %s59, 1
        %s313 = scalar_lea.sflag [#allocation3], %s312
        %s314 = sand.u32 %s59, 1
        %s315 = smul.addr %s314, 128
        %s316 = scalar_lea.vmem [#allocation2], %s315
        %p317 = pneg %p72
        %p318 = pneg %p69
        %s319 = sand.u32 %s28, 1
        %s320 = scalar_lea.sflag [#allocation6], %s319
        %s321 = sand.u32 %s87, 1
        %s322 = smul.addr %s321, 128
        %s323 = scalar_lea.vmem [#allocation5], %s322
        %p324 = pneg %p100
        %p325 = pneg %p97
        %s326 = sand.u32 %s28, 1
        %s327 = scalar_lea.sflag [#allocation6], %s326
        %s328 = sand.u32 %s115, 1
        %s329 = smul.addr %s328, 128
        %s330 = scalar_lea.vmem [#allocation7], %s329
        %p331 = pneg %p128
        %p332 = pneg %p125
        %p333 = pneg %p158
        %p334 = pneg %p155
        %s335 = sand.u32 %s145, 1
        %s336 = scalar_lea.sflag [#allocation4], %s335
        %s337 = sand.u32 %s145, 1
        %s338 = smul.addr %s337, 128
        %s339 = scalar_lea.vmem [#allocation8], %s338
        %p340 = pneg %p188
        %p341 = pneg %p185
        %s342 = sand.u32 %s175, 1
        %s343 = scalar_lea.sflag [#allocation10], %s342
        %s344 = sand.u32 %s175, 1
        %s345 = smul.addr %s344, 128
        %s346 = scalar_lea.vmem [#allocation9], %s345
        %s347 = smul.u32 16, %s35
        %s348 = smul.u32 16, %s35
        %s349 = smul.u32 16, %s35
        %v351 = vld [vmem:[%s289] sm:$0xff]
        %v352 = vld [vmem:[%s289 + $0x8] sm:$0xff]
        %v353 = vld [vmem:[%s289 + $0x10] sm:$0xff]
        %v354 = vld [vmem:[%s289 + $0x18] sm:$0xff]
        %v355 = vld [vmem:[%s289 + $0x20] sm:$0xff]
        %v356 = vld [vmem:[%s289 + $0x28] sm:$0xff]
        %v357 = vld [vmem:[%s289 + $0x30] sm:$0xff]
        %v358 = vld [vmem:[%s289 + $0x38] sm:$0xff]
        %v359 = vld [vmem:[%s289 + $0x40] sm:$0xff]
        %v360 = vld [vmem:[%s289 + $0x48] sm:$0xff]
        %v361 = vld [vmem:[%s289 + $0x50] sm:$0xff]
        %v362 = vld [vmem:[%s289 + $0x58] sm:$0xff]
        %v363 = vld [vmem:[%s289 + $0x60] sm:$0xff]
        %v364 = vld [vmem:[%s289 + $0x68] sm:$0xff]
        %v365 = vld [vmem:[%s289 + $0x70] sm:$0xff]
        %v366 = vld [vmem:[%s289 + $0x78] sm:$0xff]
        %v367 = vmul.f32 %v351, 0.088388346
        %v368 = vmul.f32 %v352, 0.088388346
        %v369 = vmul.f32 %v353, 0.088388346
        %v370 = vmul.f32 %v354, 0.088388346
        %v371 = vmul.f32 %v355, 0.088388346
        %v372 = vmul.f32 %v356, 0.088388346
        %v373 = vmul.f32 %v357, 0.088388346
        %v374 = vmul.f32 %v358, 0.088388346
        %v375 = vmul.f32 %v359, 0.088388346
        %v376 = vmul.f32 %v360, 0.088388346
        %v377 = vmul.f32 %v361, 0.088388346
        %v378 = vmul.f32 %v362, 0.088388346
        %v379 = vmul.f32 %v363, 0.088388346
        %v380 = vmul.f32 %v364, 0.088388346
        %v381 = vmul.f32 %v365, 0.088388346
        %v382 = vmul.f32 %v366, 0.088388346
        %v383 = vpack.c.bf16 %v368, %v367
        %v384 = vpack.c.bf16 %v370, %v369
        %v385 = vpack.c.bf16 %v372, %v371
        %v386 = vpack.c.bf16 %v374, %v373
        %v387 = vpack.c.bf16 %v376, %v375
        %v388 = vpack.c.bf16 %v378, %v377
        %v389 = vpack.c.bf16 %v380, %v379
        %v390 = vpack.c.bf16 %v382, %v381
        %v391 = vld [vmem:[%s298] sm:$0xff]
        %v392 = vld [vmem:[%s298 + $0x8] sm:$0xff]
        %v393 = vld [vmem:[%s298 + $0x10] sm:$0xff]
        %v394 = vld [vmem:[%s298 + $0x18] sm:$0xff]
        %v395 = vld [vmem:[%s298 + $0x20] sm:$0xff]
        %v396 = vld [vmem:[%s298 + $0x28] sm:$0xff]
        %v397 = vld [vmem:[%s298 + $0x30] sm:$0xff]
        %v398 = vld [vmem:[%s298 + $0x38] sm:$0xff]
        %v399 = vld [vmem:[%s298 + $0x40] sm:$0xff]
        %v400 = vld [vmem:[%s298 + $0x48] sm:$0xff]
        %v401 = vld [vmem:[%s298 + $0x50] sm:$0xff]
        %v402 = vld [vmem:[%s298 + $0x58] sm:$0xff]
        %v403 = vld [vmem:[%s298 + $0x60] sm:$0xff]
        %v404 = vld [vmem:[%s298 + $0x68] sm:$0xff]
        %v405 = vld [vmem:[%s298 + $0x70] sm:$0xff]
        %v406 = vld [vmem:[%s298 + $0x78] sm:$0xff]
        %v407 = vpack.c.bf16 %v392, %v391
        %v408 = vpack.c.bf16 %v394, %v393
        %v409 = vpack.c.bf16 %v396, %v395
        %v410 = vpack.c.bf16 %v398, %v397
        %v411 = vpack.c.bf16 %v400, %v399
        %v412 = vpack.c.bf16 %v402, %v401
        %v413 = vpack.c.bf16 %v404, %v403
        %v414 = vpack.c.bf16 %v406, %v405
        %415 = vmatprep.subr.bf16.mxu0 0
        %416 = vmatpush1.bf16.xpose.msra.mxu0 %v407
        %417 = vmatprep.subr.bf16.mxu0 0
        %418 = vmatpush1.bf16.xpose.msra.mxu0 %v408
        %419 = vmatprep.subr.bf16.mxu0 0
        %420 = vmatpush1.bf16.xpose.msra.mxu0 %v409
        %421 = vmatprep.subr.bf16.mxu0 0
        %422 = vmatpush1.bf16.xpose.msra.mxu0 %v410
        %423 = vmatprep.subr.bf16.mxu0 0
        %424 = vmatpush1.bf16.xpose.msra.mxu0 %v411
        %425 = vmatprep.subr.bf16.mxu0 0
        %426 = vmatpush1.bf16.xpose.msra.mxu0 %v412
        %427 = vmatprep.subr.bf16.mxu0 0
        %428 = vmatpush1.bf16.xpose.msra.mxu0 %v413
        %429 = vmatprep.subr.bf16.mxu0 0
        %430 = vmatpush1.bf16.xpose.msra.mxu0 %v414
        %431 = vmatprep.subr.bf16.mxu0 0
        %432 = vmatpush1.bf16.xpose.msra.mxu0 0
        %433 = vmatprep.subr.bf16.mxu0 0
        %434 = vmatpush1.bf16.xpose.msra.mxu0 0
        %435 = vmatprep.subr.bf16.mxu0 0
        %436 = vmatpush1.bf16.xpose.msra.mxu0 0
        %437 = vmatprep.subr.bf16.mxu0 0
        %438 = vmatpush1.bf16.xpose.msra.mxu0 0
        %439 = vmatprep.subr.bf16.mxu0 0
        %440 = vmatpush1.bf16.xpose.msra.mxu0 0
        %441 = vmatprep.subr.bf16.mxu0 0
        %442 = vmatpush1.bf16.xpose.msra.mxu0 0
        %443 = vmatprep.subr.bf16.mxu0 0
        %444 = vmatpush1.bf16.xpose.msra.mxu0 0
        %445 = vmatprep.subr.bf16.mxu0 0
        %446 = vmatpush1.bf16.xpose.msra.mxu0 0
        %447 = vmatprep.mubr.bf16.mxu0 0
        %448 = vmatmul.mubr.bf16.gmra.mrb[0].mxu0 %v383
        %v449 = vpop.f32.mrb[0].mxu0
        %v450 = vadd.f32 0.0, %v449
        %v451 = vpop.f32.mrb[0].mxu0
        %v452 = vpop.f32.mrb[0].mxu0
        %v453 = vadd.f32 0.0, %v452
        %v454 = vpop.f32.mrb[0].mxu0
        %455 = vmatprep.mubr.bf16.mxu0 0
        %456 = vmatmul.mubr.bf16.gmra.mrb[0].mxu0 %v384
        %v457 = vpop.f32.mrb[0].mxu0
        %v458 = vadd.f32 0.0, %v457
        %v459 = vpop.f32.mrb[0].mxu0
        %v460 = vpop.f32.mrb[0].mxu0
        %v461 = vadd.f32 0.0, %v460
        %v462 = vpop.f32.mrb[0].mxu0
        %463 = vmatprep.mubr.bf16.mxu0 0
        %464 = vmatmul.mubr.bf16.gmra.mrb[0].mxu0 %v385
        %v465 = vpop.f32.mrb[0].mxu0
        %v466 = vadd.f32 0.0, %v465
        %v467 = vpop.f32.mrb[0].mxu0
        %v468 = vpop.f32.mrb[0].mxu0
        %v469 = vadd.f32 0.0, %v468
        %v470 = vpop.f32.mrb[0].mxu0
        %471 = vmatprep.mubr.bf16.mxu0 0
        %472 = vmatmul.mubr.bf16.gmra.mrb[0].mxu0 %v386
        %v473 = vpop.f32.mrb[0].mxu0
        %v474 = vadd.f32 0.0, %v473
        %v475 = vpop.f32.mrb[0].mxu0
        %v476 = vpop.f32.mrb[0].mxu0
        %v477 = vadd.f32 0.0, %v476
        %v478 = vpop.f32.mrb[0].mxu0
        %479 = vmatprep.mubr.bf16.mxu0 0
        %480 = vmatmul.mubr.bf16.gmra.mrb[0].mxu0 %v387
        %v481 = vpop.f32.mrb[0].mxu0
        %v482 = vadd.f32 0.0, %v481
        %v483 = vpop.f32.mrb[0].mxu0
        %v484 = vpop.f32.mrb[0].mxu0
        %v485 = vadd.f32 0.0, %v484
        %v486 = vpop.f32.mrb[0].mxu0
        %487 = vmatprep.mubr.bf16.mxu0 0
        %488 = vmatmul.mubr.bf16.gmra.mrb[0].mxu0 %v388
        %v489 = vpop.f32.mrb[0].mxu0
        %v490 = vadd.f32 0.0, %v489
        %v491 = vpop.f32.mrb[0].mxu0
        %v492 = vpop.f32.mrb[0].mxu0
        %v493 = vadd.f32 0.0, %v492
        %v494 = vpop.f32.mrb[0].mxu0
        %495 = vmatprep.mubr.bf16.mxu0 0
        %496 = vmatmul.mubr.bf16.gmra.mrb[0].mxu0 %v389
        %v497 = vpop.f32.mrb[0].mxu0
        %v498 = vadd.f32 0.0, %v497
        %v499 = vpop.f32.mrb[0].mxu0
        %v500 = vpop.f32.mrb[0].mxu0
        %v501 = vadd.f32 0.0, %v500
        %v502 = vpop.f32.mrb[0].mxu0
        %503 = vmatprep.mubr.bf16.mxu0 0
        %504 = vmatmul.mubr.bf16.gmra.mrb[0].mxu0 %v390
        %v505 = vpop.f32.mrb[0].mxu0
        %v506 = vadd.f32 0.0, %v505
        %v507 = vpop.f32.mrb[0].mxu0
        %v508 = vpop.f32.mrb[0].mxu0
        %v509 = vadd.f32 0.0, %v508
        %v510 = vpop.f32.mrb[0].mxu0
        %511 = vdwg.mxu0
        %s512 = smul.u32 %s35, 128
        %v513 = vlaneseq
        %v514 = vshrl.u32 %v513, 7
        %v515 = vadd.s32 %v514, 8
        %v516 = vadd.s32 %v514, 16
        %v517 = vadd.s32 %v514, 24
        %v518 = vadd.s32 %v514, 32
        %v519 = vadd.s32 %v514, 40
        %v520 = vadd.s32 %v514, 48
        %v521 = vadd.s32 %v514, 56
        %v522 = vadd.s32 %v514, 64
        %v523 = vadd.s32 %v514, 72
        %v524 = vadd.s32 %v514, 80
        %v525 = vadd.s32 %v514, 88
        %v526 = vadd.s32 %v514, 96
        %v527 = vadd.s32 %v514, 104
        %v528 = vadd.s32 %v514, 112
        %v529 = vadd.s32 %v514, 120
        %v530 = vstv %s512
        %v531 = vadd.s32 %v514, %v530
        %v532 = vadd.s32 %v515, %v530
        %v533 = vadd.s32 %v516, %v530
        %v534 = vadd.s32 %v517, %v530
        %v535 = vadd.s32 %v518, %v530
        %v536 = vadd.s32 %v519, %v530
        %v537 = vadd.s32 %v520, %v530
        %v538 = vadd.s32 %v521, %v530
        %v539 = vadd.s32 %v522, %v530
        %v540 = vadd.s32 %v523, %v530
        %v541 = vadd.s32 %v524, %v530
        %v542 = vadd.s32 %v525, %v530
        %v543 = vadd.s32 %v526, %v530
        %v544 = vadd.s32 %v527, %v530
        %v545 = vadd.s32 %v528, %v530
        %v546 = vadd.s32 %v529, %v530
        %v547 = vlaneseq
        %v548 = vand.u32 %v547, 127
        %vm549 = vcmp.ge.s32.totalorder %v531, %v548
        %vm550 = vcmp.ge.s32.totalorder %v532, %v548
        %vm551 = vcmp.ge.s32.totalorder %v533, %v548
        %vm552 = vcmp.ge.s32.totalorder %v534, %v548
        %vm553 = vcmp.ge.s32.totalorder %v535, %v548
        %vm554 = vcmp.ge.s32.totalorder %v536, %v548
        %vm555 = vcmp.ge.s32.totalorder %v537, %v548
        %vm556 = vcmp.ge.s32.totalorder %v538, %v548
        %vm557 = vcmp.ge.s32.totalorder %v539, %v548
        %vm558 = vcmp.ge.s32.totalorder %v540, %v548
        %vm559 = vcmp.ge.s32.totalorder %v541, %v548
        %vm560 = vcmp.ge.s32.totalorder %v542, %v548
        %vm561 = vcmp.ge.s32.totalorder %v543, %v548
        %vm562 = vcmp.ge.s32.totalorder %v544, %v548
        %vm563 = vcmp.ge.s32.totalorder %v545, %v548
        %vm564 = vcmp.ge.s32.totalorder %v546, %v548
        %v565 = vsel %vm549, %v450, -1e+09
        %v566 = vsel %vm550, %v453, -1e+09
        %v567 = vsel %vm551, %v458, -1e+09
        %v568 = vsel %vm552, %v461, -1e+09
        %v569 = vsel %vm553, %v466, -1e+09
        %v570 = vsel %vm554, %v469, -1e+09
        %v571 = vsel %vm555, %v474, -1e+09
        %v572 = vsel %vm556, %v477, -1e+09
        %v573 = vsel %vm557, %v482, -1e+09
        %v574 = vsel %vm558, %v485, -1e+09
        %v575 = vsel %vm559, %v490, -1e+09
        %v576 = vsel %vm560, %v493, -1e+09
        %v577 = vsel %vm561, %v498, -1e+09
        %v578 = vsel %vm562, %v501, -1e+09
        %v579 = vsel %vm563, %v506, -1e+09
        %v580 = vsel %vm564, %v509, -1e+09
        %581 = vmax.xlane.f32.xlu0 %v565
        %v582 = vpop.xlane.xlu0 %581
        %583 = vmax.xlane.f32.xlu0 %v566
        %v584 = vpop.xlane.xlu0 %583
        %585 = vmax.xlane.f32.xlu0 %v567
        %v586 = vpop.xlane.xlu0 %585
        %587 = vmax.xlane.f32.xlu0 %v568
        %v588 = vpop.xlane.xlu0 %587
        %589 = vmax.xlane.f32.xlu0 %v569
        %v590 = vpop.xlane.xlu0 %589
        %591 = vmax.xlane.f32.xlu0 %v570
        %v592 = vpop.xlane.xlu0 %591
        %593 = vmax.xlane.f32.xlu0 %v571
        %v594 = vpop.xlane.xlu0 %593
        %595 = vmax.xlane.f32.xlu0 %v572
        %v596 = vpop.xlane.xlu0 %595
        %597 = vmax.xlane.f32.xlu0 %v573
        %v598 = vpop.xlane.xlu0 %597
        %599 = vmax.xlane.f32.xlu0 %v574
        %v600 = vpop.xlane.xlu0 %599
        %601 = vmax.xlane.f32.xlu0 %v575
        %v602 = vpop.xlane.xlu0 %601
        %603 = vmax.xlane.f32.xlu0 %v576
        %v604 = vpop.xlane.xlu0 %603
        %605 = vmax.xlane.f32.xlu0 %v577
        %v606 = vpop.xlane.xlu0 %605
        %607 = vmax.xlane.f32.xlu0 %v578
        %v608 = vpop.xlane.xlu0 %607
        %609 = vmax.xlane.f32.xlu0 %v579
        %v610 = vpop.xlane.xlu0 %609
        %611 = vmax.xlane.f32.xlu0 %v580
        %v612 = vpop.xlane.xlu0 %611
        %v613 = vsub.f32 %v565, %v582
        %v614 = vsub.f32 %v566, %v584
        %v615 = vsub.f32 %v567, %v586
        %v616 = vsub.f32 %v568, %v588
        %v617 = vsub.f32 %v569, %v590
        %v618 = vsub.f32 %v570, %v592
        %v619 = vsub.f32 %v571, %v594
        %v620 = vsub.f32 %v572, %v596
        %v621 = vsub.f32 %v573, %v598
        %v622 = vsub.f32 %v574, %v600
        %v623 = vsub.f32 %v575, %v602
        %v624 = vsub.f32 %v576, %v604
        %v625 = vsub.f32 %v577, %v606
        %v626 = vsub.f32 %v578, %v608
        %v627 = vsub.f32 %v579, %v610
        %v628 = vsub.f32 %v580, %v612
        %v629 = vmul.f32 %v613, 1.442695
        %v630 = vpow.pop %v629
        %v631 = vmul.f32 %v614, 1.442695
        %v632 = vpow.pop %v631
        %v633 = vmul.f32 %v615, 1.442695
        %v634 = vpow.pop %v633
        %v635 = vmul.f32 %v616, 1.442695
        %v636 = vpow.pop %v635
        %v637 = vmul.f32 %v617, 1.442695
        %v638 = vpow.pop %v637
        %v639 = vmul.f32 %v618, 1.442695
        %v640 = vpow.pop %v639
        %v641 = vmul.f32 %v619, 1.442695
        %v642 = vpow.pop %v641
        %v643 = vmul.f32 %v620, 1.442695
        %v644 = vpow.pop %v643
        %v645 = vmul.f32 %v621, 1.442695
        %v646 = vpow.pop %v645
        %v647 = vmul.f32 %v622, 1.442695
        %v648 = vpow.pop %v647
        %v649 = vmul.f32 %v623, 1.442695
        %v650 = vpow.pop %v649
        %v651 = vmul.f32 %v624, 1.442695
        %v652 = vpow.pop %v651
        %v653 = vmul.f32 %v625, 1.442695
        %v654 = vpow.pop %v653
        %v655 = vmul.f32 %v626, 1.442695
        %v656 = vpow.pop %v655
        %v657 = vmul.f32 %v627, 1.442695
        %v658 = vpow.pop %v657
        %v659 = vmul.f32 %v628, 1.442695
        %v660 = vpow.pop %v659
        %661 = vadd.xlane.f32.xlu0 %v630
        %v662 = vpop.xlane.xlu0 %661
        %663 = vadd.xlane.f32.xlu0 %v632
        %v664 = vpop.xlane.xlu0 %663
        %665 = vadd.xlane.f32.xlu0 %v634
        %v666 = vpop.xlane.xlu0 %665
        %667 = vadd.xlane.f32.xlu0 %v636
        %v668 = vpop.xlane.xlu0 %667
        %669 = vadd.xlane.f32.xlu0 %v638
        %v670 = vpop.xlane.xlu0 %669
        %671 = vadd.xlane.f32.xlu0 %v640
        %v672 = vpop.xlane.xlu0 %671
        %673 = vadd.xlane.f32.xlu0 %v642
        %v674 = vpop.xlane.xlu0 %673
        %675 = vadd.xlane.f32.xlu0 %v644
        %v676 = vpop.xlane.xlu0 %675
        %677 = vadd.xlane.f32.xlu0 %v646
        %v678 = vpop.xlane.xlu0 %677
        %679 = vadd.xlane.f32.xlu0 %v648
        %v680 = vpop.xlane.xlu0 %679
        %681 = vadd.xlane.f32.xlu0 %v650
        %v682 = vpop.xlane.xlu0 %681
        %683 = vadd.xlane.f32.xlu0 %v652
        %v684 = vpop.xlane.xlu0 %683
        %685 = vadd.xlane.f32.xlu0 %v654
        %v686 = vpop.xlane.xlu0 %685
        %687 = vadd.xlane.f32.xlu0 %v656
        %v688 = vpop.xlane.xlu0 %687
        %689 = vadd.xlane.f32.xlu0 %v658
        %v690 = vpop.xlane.xlu0 %689
        %691 = vadd.xlane.f32.xlu0 %v660
        %v692 = vpop.xlane.xlu0 %691
        %v693 = vrcp.pop %v662
        %v694 = vmul.f32 %v630, %v693
        %v695 = vrcp.pop %v664
        %v696 = vmul.f32 %v632, %v695
        %v697 = vrcp.pop %v666
        %v698 = vmul.f32 %v634, %v697
        %v699 = vrcp.pop %v668
        %v700 = vmul.f32 %v636, %v699
        %v701 = vrcp.pop %v670
        %v702 = vmul.f32 %v638, %v701
        %v703 = vrcp.pop %v672
        %v704 = vmul.f32 %v640, %v703
        %v705 = vrcp.pop %v674
        %v706 = vmul.f32 %v642, %v705
        %v707 = vrcp.pop %v676
        %v708 = vmul.f32 %v644, %v707
        %v709 = vrcp.pop %v678
        %v710 = vmul.f32 %v646, %v709
        %v711 = vrcp.pop %v680
        %v712 = vmul.f32 %v648, %v711
        %v713 = vrcp.pop %v682
        %v714 = vmul.f32 %v650, %v713
        %v715 = vrcp.pop %v684
        %v716 = vmul.f32 %v652, %v715
        %v717 = vrcp.pop %v686
        %v718 = vmul.f32 %v654, %v717
        %v719 = vrcp.pop %v688
        %v720 = vmul.f32 %v656, %v719
        %v721 = vrcp.pop %v690
        %v722 = vmul.f32 %v658, %v721
        %v723 = vrcp.pop %v692
        %v724 = vmul.f32 %v660, %v723
        %725 = vst [vmem:[%s346] sm:$0xff] %v694
        %726 = vst [vmem:[%s346 + $0x8] sm:$0xff] %v696
        %727 = vst [vmem:[%s346 + $0x10] sm:$0xff] %v698
        %728 = vst [vmem:[%s346 + $0x18] sm:$0xff] %v700
        %729 = vst [vmem:[%s346 + $0x20] sm:$0xff] %v702
        %730 = vst [vmem:[%s346 + $0x28] sm:$0xff] %v704
        %731 = vst [vmem:[%s346 + $0x30] sm:$0xff] %v706
        %732 = vst [vmem:[%s346 + $0x38] sm:$0xff] %v708
        %733 = vst [vmem:[%s346 + $0x40] sm:$0xff] %v710
        %734 = vst [vmem:[%s346 + $0x48] sm:$0xff] %v712
        %735 = vst [vmem:[%s346 + $0x50] sm:$0xff] %v714
        %736 = vst [vmem:[%s346 + $0x58] sm:$0xff] %v716
        %737 = vst [vmem:[%s346 + $0x60] sm:$0xff] %v718
        %738 = vst [vmem:[%s346 + $0x68] sm:$0xff] %v720
        %739 = vst [vmem:[%s346 + $0x70] sm:$0xff] %v722
        %740 = vst [vmem:[%s346 + $0x78] sm:$0xff] %v724
        %v741 = vpack.c.bf16 %v696, %v694
        %v742 = vpack.c.bf16 %v700, %v698
        %v743 = vpack.c.bf16 %v704, %v702
        %v744 = vpack.c.bf16 %v708, %v706
        %v745 = vpack.c.bf16 %v712, %v710
        %v746 = vpack.c.bf16 %v716, %v714
        %v747 = vpack.c.bf16 %v720, %v718
        %v748 = vpack.c.bf16 %v724, %v722
        %v749 = vld [vmem:[%s307] sm:$0xff]
        %v750 = vld [vmem:[%s307 + $0x8] sm:$0xff]
        %v751 = vld [vmem:[%s307 + $0x10] sm:$0xff]
        %v752 = vld [vmem:[%s307 + $0x18] sm:$0xff]
        %v753 = vld [vmem:[%s307 + $0x20] sm:$0xff]
        %v754 = vld [vmem:[%s307 + $0x28] sm:$0xff]
        %v755 = vld [vmem:[%s307 + $0x30] sm:$0xff]
        %v756 = vld [vmem:[%s307 + $0x38] sm:$0xff]
        %v757 = vld [vmem:[%s307 + $0x40] sm:$0xff]
        %v758 = vld [vmem:[%s307 + $0x48] sm:$0xff]
        %v759 = vld [vmem:[%s307 + $0x50] sm:$0xff]
        %v760 = vld [vmem:[%s307 + $0x58] sm:$0xff]
        %v761 = vld [vmem:[%s307 + $0x60] sm:$0xff]
        %v762 = vld [vmem:[%s307 + $0x68] sm:$0xff]
        %v763 = vld [vmem:[%s307 + $0x70] sm:$0xff]
        %v764 = vld [vmem:[%s307 + $0x78] sm:$0xff]
        %v765 = vpack.c.bf16 %v750, %v749
        %v766 = vpack.c.bf16 %v752, %v751
        %v767 = vpack.c.bf16 %v754, %v753
        %v768 = vpack.c.bf16 %v756, %v755
        %v769 = vpack.c.bf16 %v758, %v757
        %v770 = vpack.c.bf16 %v760, %v759
        %v771 = vpack.c.bf16 %v762, %v761
        %v772 = vpack.c.bf16 %v764, %v763
        %773 = vmatprep.subr.bf16.mxu0 0
        %774 = vmatpush1.bf16.msra.mxu0 %v765
        %775 = vmatprep.subr.bf16.mxu0 0
        %776 = vmatpush1.bf16.msra.mxu0 %v766
        %777 = vmatprep.subr.bf16.mxu0 0
        %778 = vmatpush1.bf16.msra.mxu0 %v767
        %779 = vmatprep.subr.bf16.mxu0 0
        %780 = vmatpush1.bf16.msra.mxu0 %v768
        %781 = vmatprep.subr.bf16.mxu0 0
        %782 = vmatpush1.bf16.msra.mxu0 %v769
        %783 = vmatprep.subr.bf16.mxu0 0
        %784 = vmatpush1.bf16.msra.mxu0 %v770
        %785 = vmatprep.subr.bf16.mxu0 0
        %786 = vmatpush1.bf16.msra.mxu0 %v771
        %787 = vmatprep.subr.bf16.mxu0 0
        %788 = vmatpush1.bf16.msra.mxu0 %v772
        %789 = vmatprep.subr.bf16.mxu0 0
        %790 = vmatpush1.bf16.msra.mxu0 0
        %791 = vmatprep.subr.bf16.mxu0 0
        %792 = vmatpush1.bf16.msra.mxu0 0
        %793 = vmatprep.subr.bf16.mxu0 0
        %794 = vmatpush1.bf16.msra.mxu0 0
        %795 = vmatprep.subr.bf16.mxu0 0
        %796 = vmatpush1.bf16.msra.mxu0 0
        %797 = vmatprep.subr.bf16.mxu0 0
        %798 = vmatpush1.bf16.msra.mxu0 0
        %799 = vmatprep.subr.bf16.mxu0 0
        %800 = vmatpush1.bf16.msra.mxu0 0
        %801 = vmatprep.subr.bf16.mxu0 0
        %802 = vmatpush1.bf16.msra.mxu0 0
        %803 = vmatprep.subr.bf16.mxu0 0
        %804 = vmatpush1.bf16.msra.mxu0 0
        %805 = vmatprep.mubr.bf16.mxu0 0
        %806 = vmatmul.mubr.bf16.gmra.mrb[0].mxu0 %v741
        %v807 = vpop.f32.mrb[0].mxu0
        %v808 = vadd.f32 0.0, %v807
        %v809 = vpop.f32.mrb[0].mxu0
        %v810 = vpop.f32.mrb[0].mxu0
        %v811 = vadd.f32 0.0, %v810
        %v812 = vpop.f32.mrb[0].mxu0
        %813 = vmatprep.mubr.bf16.mxu0 0
        %814 = vmatmul.mubr.bf16.gmra.mrb[0].mxu0 %v742
        %v815 = vpop.f32.mrb[0].mxu0
        %v816 = vadd.f32 0.0, %v815
        %v817 = vpop.f32.mrb[0].mxu0
        %v818 = vpop.f32.mrb[0].mxu0
        %v819 = vadd.f32 0.0, %v818
        %v820 = vpop.f32.mrb[0].mxu0
        %821 = vmatprep.mubr.bf16.mxu0 0
        %822 = vmatmul.mubr.bf16.gmra.mrb[0].mxu0 %v743
        %v823 = vpop.f32.mrb[0].mxu0
        %v824 = vadd.f32 0.0, %v823
        %v825 = vpop.f32.mrb[0].mxu0
        %v826 = vpop.f32.mrb[0].mxu0
        %v827 = vadd.f32 0.0, %v826
        %v828 = vpop.f32.mrb[0].mxu0
        %829 = vmatprep.mubr.bf16.mxu0 0
        %830 = vmatmul.mubr.bf16.gmra.mrb[0].mxu0 %v744
        %v831 = vpop.f32.mrb[0].mxu0
        %v832 = vadd.f32 0.0, %v831
        %v833 = vpop.f32.mrb[0].mxu0
        %v834 = vpop.f32.mrb[0].mxu0
        %v835 = vadd.f32 0.0, %v834
        %v836 = vpop.f32.mrb[0].mxu0
        %837 = vmatprep.mubr.bf16.mxu0 0
        %838 = vmatmul.mubr.bf16.gmra.mrb[0].mxu0 %v745
        %v839 = vpop.f32.mrb[0].mxu0
        %v840 = vadd.f32 0.0, %v839
        %v841 = vpop.f32.mrb[0].mxu0
        %v842 = vpop.f32.mrb[0].mxu0
        %v843 = vadd.f32 0.0, %v842
        %v844 = vpop.f32.mrb[0].mxu0
        %845 = vmatprep.mubr.bf16.mxu0 0
        %846 = vmatmul.mubr.bf16.gmra.mrb[0].mxu0 %v746
        %v847 = vpop.f32.mrb[0].mxu0
        %v848 = vadd.f32 0.0, %v847
        %v849 = vpop.f32.mrb[0].mxu0
        %v850 = vpop.f32.mrb[0].mxu0
        %v851 = vadd.f32 0.0, %v850
        %v852 = vpop.f32.mrb[0].mxu0
        %853 = vmatprep.mubr.bf16.mxu0 0
        %854 = vmatmul.mubr.bf16.gmra.mrb[0].mxu0 %v747
        %v855 = vpop.f32.mrb[0].mxu0
        %v856 = vadd.f32 0.0, %v855
        %v857 = vpop.f32.mrb[0].mxu0
        %v858 = vpop.f32.mrb[0].mxu0
        %v859 = vadd.f32 0.0, %v858
        %v860 = vpop.f32.mrb[0].mxu0
        %861 = vmatprep.mubr.bf16.mxu0 0
        %862 = vmatmul.mubr.bf16.gmra.mrb[0].mxu0 %v748
        %v863 = vpop.f32.mrb[0].mxu0
        %v864 = vadd.f32 0.0, %v863
        %v865 = vpop.f32.mrb[0].mxu0
        %v866 = vpop.f32.mrb[0].mxu0
        %v867 = vadd.f32 0.0, %v866
        %v868 = vpop.f32.mrb[0].mxu0
        %869 = vdwg.mxu0
        %870 = vst [vmem:[%s339] sm:$0xff] %v808
        %871 = vst [vmem:[%s339 + $0x8] sm:$0xff] %v811
        %872 = vst [vmem:[%s339 + $0x10] sm:$0xff] %v816
        %873 = vst [vmem:[%s339 + $0x18] sm:$0xff] %v819
        %874 = vst [vmem:[%s339 + $0x20] sm:$0xff] %v824
        %875 = vst [vmem:[%s339 + $0x28] sm:$0xff] %v827
        %876 = vst [vmem:[%s339 + $0x30] sm:$0xff] %v832
        %877 = vst [vmem:[%s339 + $0x38] sm:$0xff] %v835
        %878 = vst [vmem:[%s339 + $0x40] sm:$0xff] %v840
        %879 = vst [vmem:[%s339 + $0x48] sm:$0xff] %v843
        %880 = vst [vmem:[%s339 + $0x50] sm:$0xff] %v848
        %881 = vst [vmem:[%s339 + $0x58] sm:$0xff] %v851
        %882 = vst [vmem:[%s339 + $0x60] sm:$0xff] %v856
        %883 = vst [vmem:[%s339 + $0x68] sm:$0xff] %v859
        %884 = vst [vmem:[%s339 + $0x70] sm:$0xff] %v864
        %885 = vst [vmem:[%s339 + $0x78] sm:$0xff] %v867
        %s886 = sand.u32 %s145, 1
        %s887 = scalar_lea.sflag [#allocation4], %s886
        %s888 = sand.u32 %s145, 1
        %s889 = smul.addr %s888, 128
        %s890 = scalar_lea.vmem [#allocation8], %s889
        %s891 = sand.u32 %s175, 1
        %s892 = scalar_lea.sflag [#allocation10], %s891
        %s893 = sand.u32 %s175, 1
        %s894 = smul.addr %s893, 128
        %s895 = scalar_lea.vmem [#allocation9], %s894
        // Predicated region
        $region45: #{tpu_custom_call.1} parent=31 // pred_check
          %p896 = pneg %p155
        $region46: #{tpu_custom_call.1} parent=31 // pred_check_branch
          %898 = sbr.rel (%p896) target = $region48
        $region47: #{tpu_custom_call.1} parent=31 // pred_region
          %s899 = smul.u32 16, %s35
          %s901 = ssub.s32 2048, 2048
          %902 = vsyncadd %s887, %s901
          %s903 = smul.addr %s34, 16
          %s904 = sadd.s32 %s899, %s903
          %s905 = smul.addr %s33, 64
          %s906 = sadd.s32 %s904, %s905
          %s907 = smul.addr %s906, 128
          %s908 = scalar_lea.hbm %s3, %s907
          %s909 = sshll.u32 %s890, 4
          %s910 = int_to_ptr.vmem [resolvable:$true] %s909
          %915 = dma.vmem_to_hbm [thread:$0]  %s910, 2048, %s908, %s887, 128, 128, 8
        $region48: #{tpu_custom_call.1} parent=31 // pred_fallthru
          _
        // Predicated region
        $region49: #{tpu_custom_call.1} parent=31 // pred_check
          %p916 = pneg %p185
        $region50: #{tpu_custom_call.1} parent=31 // pred_check_branch
          %918 = sbr.rel (%p916) target = $region52
        $region51: #{tpu_custom_call.1} parent=31 // pred_region
          %s919 = smul.u32 16, %s35
          %s921 = ssub.s32 2048, 2048
          %922 = vsyncadd %s892, %s921
          %s923 = smul.addr %s34, 16
          %s924 = sadd.s32 %s919, %s923
          %s925 = smul.addr %s33, 64
          %s926 = sadd.s32 %s924, %s925
          %s927 = smul.addr %s926, 128
          %s928 = scalar_lea.hbm %s4, %s927
          %s929 = sshll.u32 %s895, 4
          %s930 = int_to_ptr.vmem [resolvable:$true] %s929
          %935 = dma.vmem_to_hbm [thread:$0]  %s930, 2048, %s928, %s892, 128, 128, 8
        $region52: #{tpu_custom_call.1} parent=31 // pred_fallthru
          _
      $region32: #{tpu_custom_call.1} parent=5 // pred_fallthru
        _
      %p936 = scmp.le.s32.totalorder 2, %s23
      // Predicated region
      $region53: #{tpu_custom_call.1} parent=5 // pred_check
        %p937 = pneg %p936
      $region54: #{tpu_custom_call.1} parent=5 // pred_check_branch
        %939 = sbr.rel (%p937) target = $region56
      $region55: #{tpu_custom_call.1} parent=5 // pred_region
        %s940 = ssub.s32 %s23, 2
        // Predicated region
        $region57: #{tpu_custom_call.1} parent=55 // pred_check
          %p941 = pneg %p161
        $region58: #{tpu_custom_call.1} parent=55 // pred_check_branch
          %943 = sbr.rel (%p941) target = $region60
        $region59: #{tpu_custom_call.1} parent=55 // pred_region
          %s944 = sand.u32 %s146, 1
          %s945 = scalar_lea.sflag [#allocation4], %s944
          %s946 = sand.u32 %s146, 1
          %s947 = smul.addr %s946, 128
          %s948 = scalar_lea.vmem [#allocation8], %s947
          %949 = dma.done %s945, 2048
        $region60: #{tpu_custom_call.1} parent=55 // pred_fallthru
          _
        // Predicated region
        $region61: #{tpu_custom_call.1} parent=55 // pred_check
          %p950 = pneg %p191
        $region62: #{tpu_custom_call.1} parent=55 // pred_check_branch
          %952 = sbr.rel (%p950) target = $region64
        $region63: #{tpu_custom_call.1} parent=55 // pred_region
          %s953 = sand.u32 %s176, 1
          %s954 = scalar_lea.sflag [#allocation10], %s953
          %s955 = sand.u32 %s176, 1
          %s956 = smul.addr %s955, 128
          %s957 = scalar_lea.vmem [#allocation9], %s956
          %958 = dma.done %s954, 2048
        $region64: #{tpu_custom_call.1} parent=55 // pred_fallthru
          _
      $region56: #{tpu_custom_call.1} parent=5 // pred_fallthru
        _
    $region6: #{tpu_custom_call.1} parent=1 // loop_footer
      %s27 = sadd.s32 1, %s23
    $region7: #{tpu_custom_call.1} parent=1 // loop_footer_branch
      %22 = sbr.rel target = $region3
    $region8: #{tpu_custom_call.1} parent=1 // loop_exit
      _
    %959 = vsyncpa [#allocation3], 1
    %s960 = scalar_lea.sflag [#allocation3], 1
    %961 = vsyncpa %s960, 1
    %962 = vsyncpa [#allocation6], 1
    %s963 = scalar_lea.sflag [#allocation6], 1
    %964 = vsyncpa %s963, 1
    %965 = vsyncpa [#allocation4], 1
    %s966 = scalar_lea.sflag [#allocation4], 1
    %967 = vsyncpa %s966, 1
    %968 = vsyncpa [#allocation10], 1
    %s969 = scalar_lea.sflag [#allocation10], 1
    %970 = vsyncpa %s969, 1

</llo_original>
